<compile_context>
chip_gen: v6e
topology: v6e:2x2x1
jax: 0.10.0
libtpu: 0.0.40
codegen_flags: <defaults>
</compile_context>

<pallas_src>
import functools

import jax
import jax.numpy as jnp
from jax.experimental import pallas as pl
from jax.experimental.pallas import tpu as pltpu

_LANE = 128


def _round_up(x, m):
    return ((x + m - 1) // m) * m


def _sublane(dtype):
    # native second-minor tile: 16 for 16-bit dtypes, 8 for 32-bit
    return 16 if jnp.dtype(dtype).itemsize == 2 else 8


# ---------------------------------------------------------------------------
# Kernel: fused 3-layer ReLU MLP on one batch tile.
#   x_ref  : [TB, d_in]      bf16/f32, feature dim unpadded
#   w1_ref : [d_in, H_p]     w2_ref: [H_p, H_p]     w3_ref: [H_p, DOUT_p]
#   b*_ref : [1, F]          f32
#   o_ref  : [TB, DOUT_p]    f32, lane-dense (128-padded)
# MXU matmuls use low-precision operands with f32 accumulation; bias add and
# ReLU stay in f32.
# ---------------------------------------------------------------------------
def _mlp_kernel(x_ref, w1_ref, b1_ref, w2_ref, b2_ref, w3_ref, b3_ref, o_ref):
    h1 = jnp.dot(x_ref[...], w1_ref[...],
                 preferred_element_type=jnp.float32) + b1_ref[...]
    h1 = jnp.maximum(h1, 0.0)

    h2 = jnp.dot(h1.astype(w2_ref.dtype), w2_ref[...],
                 preferred_element_type=jnp.float32) + b2_ref[...]
    h2 = jnp.maximum(h2, 0.0)

    out = jnp.dot(h2.astype(w3_ref.dtype), w3_ref[...],
                  preferred_element_type=jnp.float32) + b3_ref[...]
    o_ref[...] = out.astype(o_ref.dtype)


def prepare_params(params, *, use_bf16=True):
    """One-time weight preparation (pad + cast). Do this at init, not per call.

    Returns (padded_arrays, d_in, d_out). Hidden/output feature dims are
    zero-padded to the lane width (256-aligned hidden when large, for the
    256-wide MXU on v6e/v7x); the first-layer contraction dim (d_in) is left
    unpadded. Zero padding keeps the padded activation columns exactly zero
    through ReLU, so results match the unpadded network.
    """
    w1, b1, w2, b2, w3, b3 = params
    d_in, h = w1.shape
    d_out = w3.shape[1]
    h_p = _round_up(h, 256) if h > _LANE else _round_up(h, _LANE)
    d_out_p = _round_up(d_out, _LANE)
    mat_dtype = jnp.bfloat16 if use_bf16 else jnp.float32

    def pad2(a, rows, cols, dtype):
        out = jnp.zeros((rows, cols), dtype)
        return out.at[: a.shape[0], : a.shape[1]].set(a.astype(dtype))

    arrays = (
        pad2(w1, d_in, h_p, mat_dtype),                  # K (=d_in) unpadded
        pad2(b1.reshape(1, -1), 1, h_p, jnp.float32),
        pad2(w2, h_p, h_p, mat_dtype),
        pad2(b2.reshape(1, -1), 1, h_p, jnp.float32),
        pad2(w3, h_p, d_out_p, mat_dtype),
        pad2(b3.reshape(1, -1), 1, d_out_p, jnp.float32),
    )
    return arrays, int(d_in), int(d_out)


@functools.partial(jax.jit, static_argnames=("d_out", "max_tile_b"))
def _forward_jit(aug_x, w1p, b1p, w2p, b2p, w3p, b3p, *, d_out, max_tile_b):
    B, d_in = aug_x.shape
    h_p = w1p.shape[1]
    d_out_p = w3p.shape[1]
    act_dtype = w1p.dtype                       # bf16 (default) or f32
    sub = _sublane(act_dtype)

    # ---- batch tiling -----------------------------------------------------
    B_p = _round_up(B, sub)                     # pad batch only to a sublane multiple
    if B_p <= 2 * sub:
        tile_b = B_p                            # tiny batch: single tile
    elif B_p <= max_tile_b:
        # >=2 grid steps so the 'parallel' axis can shard across v7x's 2 TCs.
        tile_b = _round_up(pl.cdiv(B_p, 2), sub)
    else:
        tile_b = _round_up(max_tile_b, sub)     # large tiles amortize ~0.35us/step
    grid_b = pl.cdiv(B_p, tile_b)               # last tile may be ragged (masked)

    # Cast to the matmul dtype (halves the dominant DMA stream for bf16) and
    # pad only the batch rows; this fuses with the pallas_call inside this jit.
    xp = jnp.pad(aug_x.astype(act_dtype), ((0, B_p - B), (0, 0)))

    # ---- cost estimate (advisory) ------------------------------------------
    act_itemsize = jnp.dtype(act_dtype).itemsize
    w_bytes = (w1p.size * w1p.dtype.itemsize + w2p.size * w2p.dtype.itemsize
               + w3p.size * w3p.dtype.itemsize)
    b_bytes = (b1p.size + b2p.size + b3p.size) * 4
    flops = 2 * B * (d_in * h_p + h_p * h_p + h_p * d_out_p)
    bytes_accessed = (xp.size * act_itemsize + w_bytes + b_bytes
                      + B_p * d_out_p * 4)
    cost = pl.CostEstimate(flops=flops, transcendentals=0,
                           bytes_accessed=bytes_accessed)

    # ---- VMEM budget: activation tiles (double-buffered) + intermediates +
    # resident weights. Always pass an explicit, generation-agnostic limit
    # (v5e scoped default is only 16 MiB); cap at 48 MiB for v7x's 64 MiB VMEM.
    per_step_bytes = (
        2 * tile_b * d_in * act_itemsize        # x tile, double-buffered
        + 2 * tile_b * d_out_p * 4              # out tile, double-buffered
        + 3 * tile_b * h_p * 4                  # h1/h2 intermediates (+ cast copy)
        + 2 * (w_bytes + b_bytes)               # weights (worst case 2 buffers)
    )
    vmem_limit = int(min(max(2 * per_step_bytes, 32 * 1024 * 1024),
                         48 * 1024 * 1024))

    # Weights/biases are grid-invariant; single-buffer them once they are big
    # so the pipeline doesn't double their resident footprint.
    weight_kwargs = {}
    if w_bytes > 8 * 1024 * 1024:
        weight_kwargs = dict(pipeline_mode=pl.Buffered(1))

    def resident(shape):
        return pl.BlockSpec(shape, lambda i: (0, 0), **weight_kwargs)

    out_p = pl.pallas_call(
        _mlp_kernel,
        out_shape=jax.ShapeDtypeStruct((B_p, d_out_p), jnp.float32),
        grid_spec=pltpu.PrefetchScalarGridSpec(
            num_scalar_prefetch=0,
            grid=(grid_b,),
            in_specs=[
                pl.BlockSpec((tile_b, d_in), lambda i: (i, 0)),   # x tile
                resident(w1p.shape), resident(b1p.shape),
                resident(w2p.shape), resident(b2p.shape),
                resident(w3p.shape), resident(b3p.shape),
            ],
            out_specs=pl.BlockSpec((tile_b, d_out_p), lambda i: (i, 0)),
        ),
        compiler_params=pltpu.CompilerParams(
            dimension_semantics=("parallel",),
            vmem_limit_bytes=vmem_limit,
        ),
        cost_estimate=cost,
    )(xp, w1p, b1p, w2p, b2p, w3p, b3p)

    # Strip batch / lane padding and restore caller dtype (fused in this jit).
    return out_p[:B, :d_out].astype(aug_x.dtype)


def open_loop_dynamics_forward(aug_x, prepared, *, max_tile_b=2048):
    """Pallas equivalent of OpenLoopDynamics.forward(aug_x) == net(aug_x)."""
    (w1p, b1p, w2p, b2p, w3p, b3p), d_in, d_out = prepared
    if aug_x.shape[-1] != d_in:
        raise ValueError(f"expected aug_x last dim {d_in}, got {aug_x.shape[-1]}")
    return _forward_jit(aug_x, w1p, b1p, w2p, b2p, w3p, b3p,
                        d_out=d_out, max_tile_b=max_tile_b)


def init_params(key, d_in, hidden, d_out, dtype=jnp.float32):
    """Deterministic synthetic MLP params (nn.Linear-style uniform init)."""
    ks = jax.random.split(key, 6)

    def lin(kw, kb, fan_in, fan_out):
        bound = 1.0 / jnp.sqrt(fan_in)
        w = jax.random.uniform(kw, (fan_in, fan_out), dtype, -bound, bound)
        b = jax.random.uniform(kb, (fan_out,), dtype, -bound, bound)
        return w, b

    w1, b1 = lin(ks[0], ks[1], d_in, hidden)
    w2, b2 = lin(ks[2], ks[3], hidden, hidden)
    w3, b3 = lin(ks[4], ks[5], hidden, d_out)
    return (w1, b1, w2, b2, w3, b3)


def reference_forward(aug_x, params):
    w1, b1, w2, b2, w3, b3 = params
    h1 = jnp.maximum(aug_x @ w1 + b1, 0.0)
    h2 = jnp.maximum(h1 @ w2 + b2, 0.0)
    return h2 @ w3 + b3


if __name__ == "__main__":
    # Shapes consistent with the module: x_dim=4, u_dim=2 -> aug_x dim 6.
    x_dim, u_dim, hidden, batch = 4, 2, 32, 48
    d_in = x_dim + u_dim

    key = jax.random.PRNGKey(0)
    k_x, k_u, k_p = jax.random.split(key, 3)

    x = jax.random.normal(k_x, (batch, x_dim), jnp.float32)
    u = jax.random.normal(k_u, (batch, u_dim), jnp.float32)
    aug_x = jnp.concatenate([x, u], axis=-1)          # [B, x_dim + u_dim]

    params = init_params(k_p, d_in, hidden, x_dim)
    ref = reference_forward(aug_x, params)

    # Default bf16-MXU path: weights prepared once, multi-tile grid + ragged
    # last batch tile exercised (B=48 -> 2 tiles of 32 on the bf16 path).
    prep_bf16 = prepare_params(params, use_bf16=True)
    out = jax.block_until_ready(open_loop_dynamics_forward(aug_x, prep_bf16))
    assert out.shape == (batch, x_dim)
    assert jnp.allclose(out, ref, atol=5e-2, rtol=5e-2), "bf16 mismatch vs reference"

    # Ragged batch (B=13, not a sublane multiple): handled by 8/16-row padding.
    out13 = jax.block_until_ready(open_loop_dynamics_forward(aug_x[:13], prep_bf16))
    assert out13.shape == (13, x_dim)
    assert jnp.allclose(out13, ref[:13], atol=5e-2, rtol=5e-2), "ragged mismatch"

    # Exact f32 end-to-end path (use_bf16=False) for callers needing parity.
    prep_f32 = prepare_params(params, use_bf16=False)
    out32 = jax.block_until_ready(open_loop_dynamics_forward(aug_x, prep_f32))
    assert jnp.allclose(out32, ref, atol=1e-5, rtol=1e-5), "f32 mismatch vs reference"

    print("KERNEL_OK")
</pallas_src>

<mosaic_0001>
module attributes {stable_mosaic.version = 11 : i64} {
  func.func @_mlp_kernel(%arg0: i32, %arg1: memref<32x6xbf16, #tpu.memory_space<vmem>>, %arg2: memref<6x128xbf16, #tpu.memory_space<vmem>>, %arg3: memref<1x128xf32, #tpu.memory_space<vmem>>, %arg4: memref<128x128xbf16, #tpu.memory_space<vmem>>, %arg5: memref<1x128xf32, #tpu.memory_space<vmem>>, %arg6: memref<128x128xbf16, #tpu.memory_space<vmem>>, %arg7: memref<1x128xf32, #tpu.memory_space<vmem>>, %arg8: memref<32x128xf32, #tpu.memory_space<vmem>>) attributes {dimension_semantics = [#tpu.dimension_semantics<parallel>], iteration_bounds = array<i64: 2>, scalar_prefetch = 0 : i64, scratch_operands = 0 : i64, tpu.core_type = #tpu.core_type<tc>, window_params = [{transform_indices = @transform_0, window_bounds = array<i64: 32, 6>}, {pipeline_mode = #tpu.pipeline_mode<synchronous>, transform_indices = @transform_1, window_bounds = array<i64: 6, 128>}, {pipeline_mode = #tpu.pipeline_mode<synchronous>, transform_indices = @transform_2, window_bounds = array<i64: 1, 128>}, {pipeline_mode = #tpu.pipeline_mode<synchronous>, transform_indices = @transform_3, window_bounds = array<i64: 128, 128>}, {pipeline_mode = #tpu.pipeline_mode<synchronous>, transform_indices = @transform_4, window_bounds = array<i64: 1, 128>}, {pipeline_mode = #tpu.pipeline_mode<synchronous>, transform_indices = @transform_5, window_bounds = array<i64: 128, 128>}, {pipeline_mode = #tpu.pipeline_mode<synchronous>, transform_indices = @transform_6, window_bounds = array<i64: 1, 128>}, {transform_indices = @transform_7, window_bounds = array<i64: 32, 128>}]} {
    %c0 = arith.constant 0 : index
    %c0_0 = arith.constant 0 : index
    %0 = vector.load %arg1[%c0, %c0_0] : memref<32x6xbf16, #tpu.memory_space<vmem>>, vector<32x6xbf16>
    %c0_1 = arith.constant 0 : index
    %c0_2 = arith.constant 0 : index
    %1 = vector.load %arg2[%c0_1, %c0_2] : memref<6x128xbf16, #tpu.memory_space<vmem>>, vector<6x128xbf16>
    %cst = arith.constant dense<0.000000e+00> : vector<32x128xf32>
    %2 = tpu.matmul %0, %1, %cst {dimension_numbers = #tpu.dot_dimension_numbers<[1], [0], [0], [1], [0, 0, 1, 1], [], []>} : vector<32x6xbf16>, vector<6x128xbf16>, vector<32x128xf32> -> vector<32x128xf32>
    %c0_3 = arith.constant 0 : index
    %c0_4 = arith.constant 0 : index
    %3 = vector.load %arg3[%c0_3, %c0_4] : memref<1x128xf32, #tpu.memory_space<vmem>>, vector<1x128xf32>
    %4 = vector.broadcast %3 : vector<1x128xf32> to vector<32x128xf32>
    %5 = arith.addf %2, %4 : vector<32x128xf32>
    %cst_5 = arith.constant 0.000000e+00 : f32
    %6 = vector.broadcast %cst_5 : f32 to vector<32x128xf32>
    %7 = arith.maximumf %5, %6 : vector<32x128xf32>
    %8 = arith.truncf %7 : vector<32x128xf32> to vector<32x128xbf16>
    %c0_6 = arith.constant 0 : index
    %c0_7 = arith.constant 0 : index
    %9 = vector.load %arg4[%c0_6, %c0_7] : memref<128x128xbf16, #tpu.memory_space<vmem>>, vector<128x128xbf16>
    %cst_8 = arith.constant dense<0.000000e+00> : vector<32x128xf32>
    %10 = tpu.matmul %8, %9, %cst_8 {dimension_numbers = #tpu.dot_dimension_numbers<[1], [0], [0], [1], [0, 0, 1, 1], [], []>} : vector<32x128xbf16>, vector<128x128xbf16>, vector<32x128xf32> -> vector<32x128xf32>
    %c0_9 = arith.constant 0 : index
    %c0_10 = arith.constant 0 : index
    %11 = vector.load %arg5[%c0_9, %c0_10] : memref<1x128xf32, #tpu.memory_space<vmem>>, vector<1x128xf32>
    %12 = vector.broadcast %11 : vector<1x128xf32> to vector<32x128xf32>
    %13 = arith.addf %10, %12 : vector<32x128xf32>
    %cst_11 = arith.constant 0.000000e+00 : f32
    %14 = vector.broadcast %cst_11 : f32 to vector<32x128xf32>
    %15 = arith.maximumf %13, %14 : vector<32x128xf32>
    %16 = arith.truncf %15 : vector<32x128xf32> to vector<32x128xbf16>
    %c0_12 = arith.constant 0 : index
    %c0_13 = arith.constant 0 : index
    %17 = vector.load %arg6[%c0_12, %c0_13] : memref<128x128xbf16, #tpu.memory_space<vmem>>, vector<128x128xbf16>
    %cst_14 = arith.constant dense<0.000000e+00> : vector<32x128xf32>
    %18 = tpu.matmul %16, %17, %cst_14 {dimension_numbers = #tpu.dot_dimension_numbers<[1], [0], [0], [1], [0, 0, 1, 1], [], []>} : vector<32x128xbf16>, vector<128x128xbf16>, vector<32x128xf32> -> vector<32x128xf32>
    %c0_15 = arith.constant 0 : index
    %c0_16 = arith.constant 0 : index
    %19 = vector.load %arg7[%c0_15, %c0_16] : memref<1x128xf32, #tpu.memory_space<vmem>>, vector<1x128xf32>
    %20 = vector.broadcast %19 : vector<1x128xf32> to vector<32x128xf32>
    %21 = arith.addf %18, %20 : vector<32x128xf32>
    %c0_17 = arith.constant 0 : index
    %c0_18 = arith.constant 0 : index
    %22 = vector.load %arg8[%c0_17, %c0_18] : memref<32x128xf32, #tpu.memory_space<vmem>>, vector<32x128xf32>
    tpu.vector_store %arg8[%c0_17, %c0_18], %21 {strides = array<i32>} : memref<32x128xf32, #tpu.memory_space<vmem>>, vector<32x128xf32>,
    return
  }
  func.func @transform_0(%arg0: i32) -> (i32, i32) {
    %c0_i32 = arith.constant 0 : i32
    %c0_i32_0 = arith.constant 0 : i32
    return %arg0, %c0_i32 : i32, i32
  }
  func.func @transform_1(%arg0: i32) -> (i32, i32) {
    %c0_i32 = arith.constant 0 : i32
    %c0_i32_0 = arith.constant 0 : i32
    %c0_i32_1 = arith.constant 0 : i32
    return %c0_i32, %c0_i32_0 : i32, i32
  }
  func.func @transform_2(%arg0: i32) -> (i32, i32) {
    %c0_i32 = arith.constant 0 : i32
    %c0_i32_0 = arith.constant 0 : i32
    %c0_i32_1 = arith.constant 0 : i32
    return %c0_i32, %c0_i32_0 : i32, i32
  }
  func.func @transform_3(%arg0: i32) -> (i32, i32) {
    %c0_i32 = arith.constant 0 : i32
    %c0_i32_0 = arith.constant 0 : i32
    %c0_i32_1 = arith.constant 0 : i32
    return %c0_i32, %c0_i32_0 : i32, i32
  }
  func.func @transform_4(%arg0: i32) -> (i32, i32) {
    %c0_i32 = arith.constant 0 : i32
    %c0_i32_0 = arith.constant 0 : i32
    %c0_i32_1 = arith.constant 0 : i32
    return %c0_i32, %c0_i32_0 : i32, i32
  }
  func.func @transform_5(%arg0: i32) -> (i32, i32) {
    %c0_i32 = arith.constant 0 : i32
    %c0_i32_0 = arith.constant 0 : i32
    %c0_i32_1 = arith.constant 0 : i32
    return %c0_i32, %c0_i32_0 : i32, i32
  }
  func.func @transform_6(%arg0: i32) -> (i32, i32) {
    %c0_i32 = arith.constant 0 : i32
    %c0_i32_0 = arith.constant 0 : i32
    %c0_i32_1 = arith.constant 0 : i32
    return %c0_i32, %c0_i32_0 : i32, i32
  }
  func.func @transform_7(%arg0: i32) -> (i32, i32) {
    %c0_i32 = arith.constant 0 : i32
    %c0_i32_0 = arith.constant 0 : i32
    return %arg0, %c0_i32 : i32, i32
  }
}

</mosaic_0001>

<llo_original>
// kernel: _forward_jit.1
$region0: #{_forward_jit.1}
  #allocation0 [shape = 'u32[]', space=smem, size = 0x4, offset = 0x4, fixed_abs, tag = 'smem constant byte address 0x4 - core index']
  #allocation1 [shape = 'u32[144,128]{1,0:T(1,128)}', space=vmem, size = 0x12000, scoped, tag = 'internal scratch']
  %s0 = inlined_call_operand.vmem [shape: bf16[48,6], index: 0, kind: input, shape index: {}]
  %s1 = inlined_call_operand.vmem [shape: bf16[6,128], index: 1, kind: input, shape index: {}]
  %s2 = inlined_call_operand.vmem [shape: f32[1,128], index: 2, kind: input, shape index: {}]
  %s3 = inlined_call_operand.hbm [shape: bf16[128,128], index: 3, kind: input, shape index: {}]
  %s4 = inlined_call_operand.vmem [shape: f32[1,128], index: 4, kind: input, shape index: {}]
  %s5 = inlined_call_operand.hbm [shape: bf16[128,128], index: 5, kind: input, shape index: {}]
  %s6 = inlined_call_operand.vmem [shape: f32[1,128], index: 6, kind: input, shape index: {}]
  %s7 = inlined_call_operand.vmem [shape: f32[48,128], index: 7, kind: output, shape index: {}]
  %s8 = sld [smem:[#allocation0]]
  $region117: #{_forward_jit.1} parent=0
    _
  %s10 = ssub.s32 1, %s8
  %s11 = scalar_select 0, %s10, %s8
  $region1: #{_forward_jit.1} parent=0
    #allocation2 [shape = 'u8[32768]{0}', space=vmem, size = 0x8000, scoped, tag = 'input window, operand 3, single buffered']
    #allocation3 [shape = 's32[2]{0}', space=sflag, size = 0x8, scoped, tag = 'scoped memory for _forward_jit.1']
    #allocation4 [shape = 'u8[32768]{0}', space=vmem, size = 0x8000, scoped, tag = 'input window, operand 5, single buffered']
    #allocation5 [shape = 's32[1]{0}', space=sflag, size = 0x4, scoped, tag = 'scoped memory for _forward_jit.1']
    #allocation6 [shape = 'u8[32768]{0}', space=vmem, size = 0x8000, scoped, tag = 'output window, operand 0']
    %12 = vsyncpa [#allocation3], 0
    %13 = vsyncpa [#allocation5], 0
    loop: start=0, step=1, limit=4
    $region2: #{_forward_jit.1} parent=1 // loop_pre_header
      _
    $region3: #{_forward_jit.1} parent=1 // loop_header
      %s15 = sphi 0, %s19
      %p16 = scmp.ge.s32.totalorder %s15, 4
      %s25 = sphi 0, %s27
      %s28 = sphi 0, %s25
      %s29 = sphi 0, %s28
      %s45 = sphi 0, %s29
      %s49 = sphi 0, %s49
      %s51 = sphi 0, %s49
      %s52 = sphi 0, %s51
      %s66 = sphi 0, %s52
      %s70 = sphi 0, %s70
      %s72 = sphi 0, %s70
      %s73 = sphi 0, %s72
      %s87 = sphi 0, %s73
      %s91 = sphi 0, %s91
      %s93 = sphi 0, %s91
      %s94 = sphi 0, %s93
      %s108 = sphi 0, %s94
      %s112 = sphi 0, %s112
      %s114 = sphi 0, %s112
      %s115 = sphi 0, %s114
      %s129 = sphi 0, %s115
      %s133 = sphi 0, %s133
      %s135 = sphi 0, %s133
      %s136 = sphi 0, %s135
      %s150 = sphi 0, %s136
      %s154 = sphi 0, %s154
      %s156 = sphi 0, %s154
      %s157 = sphi 0, %s156
      %s171 = sphi 0, %s157
      %s177 = sphi 0, %s179
      %s180 = sphi 0, %s177
      %s181 = sphi 0, %s180
      %s197 = sphi 0, %s181
    $region4: #{_forward_jit.1} parent=1 // loop_header_branch
      %18 = sbr.rel (%p16) target = $region8
    $region5: #{_forward_jit.1} parent=1 // loop_body
      %s20 = ssub.s32 %s15, 1
      %s21 = ssub.s32 %s15, 2
      %s22 = sadd.s32 %s15, 1
      %s23 = ssub.s32 %s15, %s22
      %p24 = scmp.eq.s32.totalorder %s23, 0
      %s26 = sadd.s32 %s25, 1
      %s27 = scalar_select %p24, %s25, %s26
      %p30 = pneg %p24
      %p31 = scmp.eq.s32.totalorder %s15, 1
      %p32 = por %p30, %p31
      %p33 = scmp.ne.s32.totalorder %s25, %s28
      %p34 = scmp.eq.s32.totalorder %s15, 0
      %p35 = por %p33, %p34
      %p36 = scmp.ne.s32.totalorder %s25, %s28
      %p37 = scmp.eq.s32.totalorder %s20, 1
      %p38 = por %p36, %p37
      %p39 = scmp.ne.s32.totalorder %s28, %s29
      %p40 = scmp.eq.s32.totalorder %s20, 0
      %p41 = por %p39, %p40
      %p42 = scmp.ne.s32.totalorder %s28, %s29
      %p43 = scmp.eq.s32.totalorder %s21, 1
      %p44 = por %p42, %p43
      %p46 = scmp.ne.s32.totalorder %s29, %s45
      %p47 = scmp.eq.s32.totalorder %s21, 0
      %p48 = por %p46, %p47
      %s50 = sadd.s32 %s49, 1
      %p53 = scmp.eq.s32.totalorder %s15, 1
      %p54 = scmp.ne.s32.totalorder %s49, %s51
      %p55 = scmp.eq.s32.totalorder %s15, 0
      %p56 = por %p54, %p55
      %p57 = scmp.ne.s32.totalorder %s49, %s51
      %p58 = scmp.eq.s32.totalorder %s20, 1
      %p59 = por %p57, %p58
      %p60 = scmp.ne.s32.totalorder %s51, %s52
      %p61 = scmp.eq.s32.totalorder %s20, 0
      %p62 = por %p60, %p61
      %p63 = scmp.ne.s32.totalorder %s51, %s52
      %p64 = scmp.eq.s32.totalorder %s21, 1
      %p65 = por %p63, %p64
      %p67 = scmp.ne.s32.totalorder %s52, %s66
      %p68 = scmp.eq.s32.totalorder %s21, 0
      %p69 = por %p67, %p68
      %s71 = sadd.s32 %s70, 1
      %p74 = scmp.eq.s32.totalorder %s15, 1
      %p75 = scmp.ne.s32.totalorder %s70, %s72
      %p76 = scmp.eq.s32.totalorder %s15, 0
      %p77 = por %p75, %p76
      %p78 = scmp.ne.s32.totalorder %s70, %s72
      %p79 = scmp.eq.s32.totalorder %s20, 1
      %p80 = por %p78, %p79
      %p81 = scmp.ne.s32.totalorder %s72, %s73
      %p82 = scmp.eq.s32.totalorder %s20, 0
      %p83 = por %p81, %p82
      %p84 = scmp.ne.s32.totalorder %s72, %s73
      %p85 = scmp.eq.s32.totalorder %s21, 1
      %p86 = por %p84, %p85
      %p88 = scmp.ne.s32.totalorder %s73, %s87
      %p89 = scmp.eq.s32.totalorder %s21, 0
      %p90 = por %p88, %p89
      %s92 = sadd.s32 %s91, 1
      %p95 = scmp.eq.s32.totalorder %s15, 1
      %p96 = scmp.ne.s32.totalorder %s91, %s93
      %p97 = scmp.eq.s32.totalorder %s15, 0
      %p98 = por %p96, %p97
      %p99 = scmp.ne.s32.totalorder %s91, %s93
      %p100 = scmp.eq.s32.totalorder %s20, 1
      %p101 = por %p99, %p100
      %p102 = scmp.ne.s32.totalorder %s93, %s94
      %p103 = scmp.eq.s32.totalorder %s20, 0
      %p104 = por %p102, %p103
      %p105 = scmp.ne.s32.totalorder %s93, %s94
      %p106 = scmp.eq.s32.totalorder %s21, 1
      %p107 = por %p105, %p106
      %p109 = scmp.ne.s32.totalorder %s94, %s108
      %p110 = scmp.eq.s32.totalorder %s21, 0
      %p111 = por %p109, %p110
      %s113 = sadd.s32 %s112, 1
      %p116 = scmp.eq.s32.totalorder %s15, 1
      %p117 = scmp.ne.s32.totalorder %s112, %s114
      %p118 = scmp.eq.s32.totalorder %s15, 0
      %p119 = por %p117, %p118
      %p120 = scmp.ne.s32.totalorder %s112, %s114
      %p121 = scmp.eq.s32.totalorder %s20, 1
      %p122 = por %p120, %p121
      %p123 = scmp.ne.s32.totalorder %s114, %s115
      %p124 = scmp.eq.s32.totalorder %s20, 0
      %p125 = por %p123, %p124
      %p126 = scmp.ne.s32.totalorder %s114, %s115
      %p127 = scmp.eq.s32.totalorder %s21, 1
      %p128 = por %p126, %p127
      %p130 = scmp.ne.s32.totalorder %s115, %s129
      %p131 = scmp.eq.s32.totalorder %s21, 0
      %p132 = por %p130, %p131
      %s134 = sadd.s32 %s133, 1
      %p137 = scmp.eq.s32.totalorder %s15, 1
      %p138 = scmp.ne.s32.totalorder %s133, %s135
      %p139 = scmp.eq.s32.totalorder %s15, 0
      %p140 = por %p138, %p139
      %p141 = scmp.ne.s32.totalorder %s133, %s135
      %p142 = scmp.eq.s32.totalorder %s20, 1
      %p143 = por %p141, %p142
      %p144 = scmp.ne.s32.totalorder %s135, %s136
      %p145 = scmp.eq.s32.totalorder %s20, 0
      %p146 = por %p144, %p145
      %p147 = scmp.ne.s32.totalorder %s135, %s136
      %p148 = scmp.eq.s32.totalorder %s21, 1
      %p149 = por %p147, %p148
      %p151 = scmp.ne.s32.totalorder %s136, %s150
      %p152 = scmp.eq.s32.totalorder %s21, 0
      %p153 = por %p151, %p152
      %s155 = sadd.s32 %s154, 1
      %p158 = scmp.eq.s32.totalorder %s15, 1
      %p159 = scmp.ne.s32.totalorder %s154, %s156
      %p160 = scmp.eq.s32.totalorder %s15, 0
      %p161 = por %p159, %p160
      %p162 = scmp.ne.s32.totalorder %s154, %s156
      %p163 = scmp.eq.s32.totalorder %s20, 1
      %p164 = por %p162, %p163
      %p165 = scmp.ne.s32.totalorder %s156, %s157
      %p166 = scmp.eq.s32.totalorder %s20, 0
      %p167 = por %p165, %p166
      %p168 = scmp.ne.s32.totalorder %s156, %s157
      %p169 = scmp.eq.s32.totalorder %s21, 1
      %p170 = por %p168, %p169
      %p172 = scmp.ne.s32.totalorder %s157, %s171
      %p173 = scmp.eq.s32.totalorder %s21, 0
      %p174 = por %p172, %p173
      %s175 = ssub.s32 %s15, %s22
      %p176 = scmp.eq.s32.totalorder %s175, 0
      %s178 = sadd.s32 %s177, 1
      %s179 = scalar_select %p176, %s177, %s178
      %p182 = pneg %p176
      %p183 = scmp.eq.s32.totalorder %s15, 1
      %p184 = por %p182, %p183
      %p185 = scmp.ne.s32.totalorder %s177, %s180
      %p186 = scmp.eq.s32.totalorder %s15, 0
      %p187 = por %p185, %p186
      %p188 = scmp.ne.s32.totalorder %s177, %s180
      %p189 = scmp.eq.s32.totalorder %s20, 1
      %p190 = por %p188, %p189
      %p191 = scmp.ne.s32.totalorder %s180, %s181
      %p192 = scmp.eq.s32.totalorder %s20, 0
      %p193 = por %p191, %p192
      %p194 = scmp.ne.s32.totalorder %s180, %s181
      %p195 = scmp.eq.s32.totalorder %s21, 1
      %p196 = por %p194, %p195
      %p198 = scmp.ne.s32.totalorder %s181, %s197
      %p199 = scmp.eq.s32.totalorder %s21, 0
      %p200 = por %p198, %p199
      %p201 = scmp.le.s32.totalorder 1, %s15
      %p202 = scmp.lt.s32.totalorder %s15, 3
      %p203 = pnand %p201, %p202
      %p204 = pneg %p203
      // Predicated region
      $region9: #{_forward_jit.1} parent=5 // pred_check
        _
      $region10: #{_forward_jit.1} parent=5 // pred_check_branch
        %206 = sbr.rel (%p203) target = $region12
      $region11: #{_forward_jit.1} parent=5 // pred_region
        %s207 = ssub.s32 %s15, 1
        // Predicated region
        $region13: #{_forward_jit.1} parent=11 // pred_check
          %p208 = pneg %p62
        $region14: #{_forward_jit.1} parent=11 // pred_check_branch
          %210 = sbr.rel (%p208) target = $region16
        $region15: #{_forward_jit.1} parent=11 // pred_region
          _
        $region16: #{_forward_jit.1} parent=11 // pred_fallthru
          _
        // Predicated region
        $region17: #{_forward_jit.1} parent=11 // pred_check
          %p211 = pneg %p83
        $region18: #{_forward_jit.1} parent=11 // pred_check_branch
          %213 = sbr.rel (%p211) target = $region20
        $region19: #{_forward_jit.1} parent=11 // pred_region
          _
        $region20: #{_forward_jit.1} parent=11 // pred_fallthru
          _
        // Predicated region
        $region21: #{_forward_jit.1} parent=11 // pred_check
          %p214 = pneg %p104
        $region22: #{_forward_jit.1} parent=11 // pred_check_branch
          %216 = sbr.rel (%p214) target = $region24
        $region23: #{_forward_jit.1} parent=11 // pred_region
          %s218 = ssub.s32 1024, 1024
          %219 = vsyncadd [#allocation3], %s218
          %s220 = sshll.u32 [#allocation2], 4
          %s221 = int_to_ptr.vmem [resolvable:$true] %s220
          %226 = dma.hbm_to_vmem [thread:$0]  %s3, 1024, %s221, [#allocation3], 64, 64, 4
        $region24: #{_forward_jit.1} parent=11 // pred_fallthru
          _
        // Predicated region
        $region25: #{_forward_jit.1} parent=11 // pred_check
          %p227 = pneg %p125
        $region26: #{_forward_jit.1} parent=11 // pred_check_branch
          %229 = sbr.rel (%p227) target = $region28
        $region27: #{_forward_jit.1} parent=11 // pred_region
          _
        $region28: #{_forward_jit.1} parent=11 // pred_fallthru
          _
        // Predicated region
        $region29: #{_forward_jit.1} parent=11 // pred_check
          %p230 = pneg %p146
        $region30: #{_forward_jit.1} parent=11 // pred_check_branch
          %232 = sbr.rel (%p230) target = $region32
        $region31: #{_forward_jit.1} parent=11 // pred_region
          %s234 = ssub.s32 1024, 1024
          %235 = vsyncadd [#allocation5], %s234
          %s236 = sshll.u32 [#allocation4], 4
          %s237 = int_to_ptr.vmem [resolvable:$true] %s236
          %242 = dma.hbm_to_vmem [thread:$0]  %s5, 1024, %s237, [#allocation5], 64, 64, 4
        $region32: #{_forward_jit.1} parent=11 // pred_fallthru
          _
        // Predicated region
        $region33: #{_forward_jit.1} parent=11 // pred_check
          %p243 = pneg %p167
        $region34: #{_forward_jit.1} parent=11 // pred_check_branch
          %245 = sbr.rel (%p243) target = $region36
        $region35: #{_forward_jit.1} parent=11 // pred_region
          _
        $region36: #{_forward_jit.1} parent=11 // pred_fallthru
          _
      $region12: #{_forward_jit.1} parent=5 // pred_fallthru
        _
      %p246 = scmp.lt.s32.totalorder %s15, 2
      // Predicated region
      $region37: #{_forward_jit.1} parent=5 // pred_check
        %p247 = pneg %p246
      $region38: #{_forward_jit.1} parent=5 // pred_check_branch
        %249 = sbr.rel (%p247) target = $region40
      $region39: #{_forward_jit.1} parent=5 // pred_region
        // Predicated region
        $region41: #{_forward_jit.1} parent=39 // pred_check
          %p250 = pneg %p35
        $region42: #{_forward_jit.1} parent=39 // pred_check_branch
          %252 = sbr.rel (%p250) target = $region44
        $region43: #{_forward_jit.1} parent=39 // pred_region
          %s253 = smul.u32 4, %s15
          %s254 = ssub.s32 6, %s253
          %p255 = scmp.lt.s32.totalorder %s254, 4
          %s256 = scalar_select %p255, %s254, 4
          %s257 = smul.u32 64, %s256
          %p258 = scmp.lt.s32.totalorder %s253, 5
          %s259 = scalar_select %p258, %s253, 5
          %s260 = smul.addr %s259, 4
          %s261 = scalar_lea.vmem %s0, %s260
          %s262 = smul.u32 4, %s15
          %s263 = ssub.s32 6, %s262
          %p264 = scmp.lt.s32.totalorder %s263, 4
          %s265 = scalar_select %p264, %s263, 4
          %s266 = smul.u32 64, %s265
        $region44: #{_forward_jit.1} parent=39 // pred_fallthru
          _
      $region40: #{_forward_jit.1} parent=5 // pred_fallthru
        _
      %p267 = scmp.le.s32.totalorder 1, %s15
      %p268 = scmp.lt.s32.totalorder %s15, 3
      %p269 = pnand %p267, %p268
      %p270 = pneg %p269
      // Predicated region
      $region45: #{_forward_jit.1} parent=5 // pred_check
        _
      $region46: #{_forward_jit.1} parent=5 // pred_check_branch
        %272 = sbr.rel (%p269) target = $region48
      $region47: #{_forward_jit.1} parent=5 // pred_region
        %s273 = ssub.s32 %s15, 1
        // Predicated region
        $region49: #{_forward_jit.1} parent=47 // pred_check
          %p274 = pneg %p104
        $region50: #{_forward_jit.1} parent=47 // pred_check_branch
          %276 = sbr.rel (%p274) target = $region52
        $region51: #{_forward_jit.1} parent=47 // pred_region
          %277 = dma.done [#allocation3], 1024
        $region52: #{_forward_jit.1} parent=47 // pred_fallthru
          _
        // Predicated region
        $region53: #{_forward_jit.1} parent=47 // pred_check
          %p278 = pneg %p146
        $region54: #{_forward_jit.1} parent=47 // pred_check_branch
          %280 = sbr.rel (%p278) target = $region56
        $region55: #{_forward_jit.1} parent=47 // pred_region
          %281 = dma.done [#allocation5], 1024
        $region56: #{_forward_jit.1} parent=47 // pred_fallthru
          _
        %s282 = smul.u32 4, %s20
        %s283 = ssub.s32 6, %s282
        %p284 = scmp.lt.s32.totalorder %s283, 4
        %s285 = scalar_select %p284, %s283, 4
        %s286 = smul.u32 64, %s285
        %p287 = scmp.lt.s32.totalorder %s282, 5
        %s288 = scalar_select %p287, %s282, 5
        %s289 = smul.addr %s288, 4
        %s290 = scalar_lea.vmem %s0, %s289
        %p291 = pneg %p41
        %p292 = pneg %p38
        %p293 = pneg %p62
        %p294 = pneg %p59
        %p295 = pneg %p83
        %p296 = pneg %p80
        %p297 = pneg %p104
        %p298 = pneg %p101
        %p299 = pneg %p125
        %p300 = pneg %p122
        %p301 = pneg %p146
        %p302 = pneg %p143
        %p303 = pneg %p167
        %p304 = pneg %p164
        %p305 = pneg %p193
        %p306 = pneg %p190
        %s307 = sand.u32 %s180, 1
        %s308 = sand.u32 %s180, 1
        %s309 = smul.addr %s308, 32
        %s310 = scalar_lea.vmem [#allocation6], %s309
        %s311 = smul.u32 4, %s20
        %s312 = ssub.s32 6, %s311
        %p313 = scmp.lt.s32.totalorder %s312, 4
        %s314 = scalar_select %p313, %s312, 4
        %s315 = smul.u32 64, %s314
        %p316 = scmp.lt.s32.totalorder %s311, 5
        %s317 = scalar_select %p316, %s311, 5
        %s318 = smul.addr %s317, 4
        %s319 = scalar_lea.vmem %s0, %s318
        %s320 = smul.u32 4, %s20
        %s321 = ssub.s32 6, %s320
        %p322 = scmp.lt.s32.totalorder %s321, 4
        %s323 = scalar_select %p322, %s321, 4
        %s324 = smul.u32 64, %s323
        %s325 = smul.u32 4, %s20
        %s326 = ssub.s32 6, %s325
        %p327 = scmp.lt.s32.totalorder %s326, 4
        %s328 = scalar_select %p327, %s326, 4
        %s329 = smul.u32 128, %s328
        %v331 = vld [vmem:[%s319] sm:$0xf]
        %v332 = vld [vmem:[%s319 + $0x4] sm:$0xf]
        %v333 = vld [vmem:[%s319 + $0x8] sm:$0xf]
        %v334 = vld [vmem:[%s319 + $0xc] sm:$0xf]
        %v335 = vld [vmem:[%s1] sm:$0x7]
        %v336 = vld [vmem:[%s2] sm:$0x1]
        %v338 = vlaneseq
        %v339 = vshrl.u32 %v338, 7
        %v340 = vsub.s32 0, %v339
        %v341 = vrot.slane %v336, %v340
        %v347 = vunpack.c.l.b16 %v331
        %v348 = vunpack.c.l.b16 %v332
        %v349 = vunpack.c.l.b16 %v333
        %v350 = vunpack.c.l.b16 %v334
        %v351 = vpack.c.b16 %v348, %v347
        %v352 = vpack.c.b16 %v350, %v349
        %vm353 = vcmask 48128
        %v355 = vsel %vm353, %v351, 0
        %v358 = vsel %vm353, %v352, 0
        %vm360 = vcmask 1042432
        %v362 = vsel %vm360, %v335, 0
        %364 = vmatprep.subr.bf16.mxu0 0
        %365 = vmatpush1.bf16.msra.mxu0 0
        %366 = vmatprep.subr.bf16.mxu0 0
        %367 = vmatpush1.bf16.msra.mxu0 0
        %368 = vmatprep.subr.bf16.mxu0 0
        %369 = vmatpush1.bf16.msra.mxu0 0
        %370 = vmatprep.subr.bf16.mxu0 0
        %371 = vmatpush1.bf16.msra.mxu0 0
        %372 = vmatprep.subr.bf16.mxu0 0
        %373 = vmatpush1.bf16.msra.mxu0 0
        %374 = vmatprep.subr.bf16.mxu0 0
        %375 = vmatpush1.bf16.msra.mxu0 0
        %376 = vmatprep.subr.bf16.mxu0 0
        %377 = vmatpush1.bf16.msra.mxu0 0
        %378 = vmatprep.subr.bf16.mxu0 0
        %379 = vmatpush1.bf16.msra.mxu0 %v362
        %380 = vmatprep.subr.bf16.mxu0 0
        %381 = vmatpush2.bf16.msra.mxu0 0
        %382 = vmatprep.subr.bf16.mxu0 0
        %383 = vmatpush2.bf16.msra.mxu0 0
        %384 = vmatprep.subr.bf16.mxu0 0
        %385 = vmatpush2.bf16.msra.mxu0 0
        %386 = vmatprep.subr.bf16.mxu0 0
        %387 = vmatpush2.bf16.msra.mxu0 0
        %388 = vmatprep.subr.bf16.mxu0 0
        %389 = vmatpush2.bf16.msra.mxu0 0
        %390 = vmatprep.subr.bf16.mxu0 0
        %391 = vmatpush2.bf16.msra.mxu0 0
        %392 = vmatprep.subr.bf16.mxu0 0
        %393 = vmatpush2.bf16.msra.mxu0 0
        %394 = vmatprep.subr.bf16.mxu0 0
        %395 = vmatpush2.bf16.msra.mxu0 0
        %396 = vmatprep.mubr.bf16.mxu0 0
        %397 = vmatmul.mubr.bf16.gmra.mxu0 %v355
        %v398 = vpop.f32.mrf.mxu0
        %v399 = vadd.f32 %v341, %v398
        %v400 = vpop.f32.mrf.mxu0
        %v401 = vpop.f32.mrf.mxu0
        %v402 = vadd.f32 %v341, %v401
        %v403 = vpop.f32.mrf.mxu0
        %404 = vmatprep.mubr.bf16.mxu0 0
        %405 = vmatmul.mubr.bf16.gmra.mxu0 %v358
        %v406 = vpop.f32.mrf.mxu0
        %v407 = vadd.f32 %v341, %v406
        %v408 = vpop.f32.mrf.mxu0
        %v409 = vpop.f32.mrf.mxu0
        %v410 = vadd.f32 %v341, %v409
        %v411 = vpop.f32.mrf.mxu0
        %412 = vdwg.mxu0
        %v413 = vmax.f32 %v399, 0.0
        %v414 = vmax.f32 %v402, 0.0
        %v415 = vmax.f32 %v407, 0.0
        %v416 = vmax.f32 %v410, 0.0
        %v417 = vpack.c.bf16 %v414, %v413
        %v418 = vpack.c.bf16 %v416, %v415
        %v419 = vld [vmem:[#allocation2] sm:$0xf]
        %v420 = vld [vmem:[#allocation2 + $0x4] sm:$0xf]
        %v421 = vld [vmem:[#allocation2 + $0x8] sm:$0xf]
        %v422 = vld [vmem:[#allocation2 + $0xc] sm:$0xf]
        %v423 = vld [vmem:[#allocation2 + $0x10] sm:$0xf]
        %v424 = vld [vmem:[#allocation2 + $0x14] sm:$0xf]
        %v425 = vld [vmem:[#allocation2 + $0x18] sm:$0xf]
        %v426 = vld [vmem:[#allocation2 + $0x1c] sm:$0xf]
        %v427 = vld [vmem:[#allocation2 + $0x20] sm:$0xf]
        %v428 = vld [vmem:[#allocation2 + $0x24] sm:$0xf]
        %v429 = vld [vmem:[#allocation2 + $0x28] sm:$0xf]
        %v430 = vld [vmem:[#allocation2 + $0x2c] sm:$0xf]
        %v431 = vld [vmem:[#allocation2 + $0x30] sm:$0xf]
        %v432 = vld [vmem:[#allocation2 + $0x34] sm:$0xf]
        %v433 = vld [vmem:[#allocation2 + $0x38] sm:$0xf]
        %v434 = vld [vmem:[#allocation2 + $0x3c] sm:$0xf]
        %v435 = vld [vmem:[%s4] sm:$0x1]
        %v437 = vlaneseq
        %v438 = vshrl.u32 %v437, 7
        %v439 = vsub.s32 0, %v438
        %v440 = vrot.slane %v435, %v439
        %v458 = vunpack.c.l.b16 %v419
        %v459 = vunpack.c.l.b16 %v420
        %v460 = vunpack.c.l.b16 %v421
        %v461 = vunpack.c.l.b16 %v422
        %v462 = vunpack.c.l.b16 %v423
        %v463 = vunpack.c.l.b16 %v424
        %v464 = vunpack.c.l.b16 %v425
        %v465 = vunpack.c.l.b16 %v426
        %v466 = vunpack.c.l.b16 %v427
        %v467 = vunpack.c.l.b16 %v428
        %v468 = vunpack.c.l.b16 %v429
        %v469 = vunpack.c.l.b16 %v430
        %v470 = vunpack.c.l.b16 %v431
        %v471 = vunpack.c.l.b16 %v432
        %v472 = vunpack.c.l.b16 %v433
        %v473 = vunpack.c.l.b16 %v434
        %v474 = vpack.c.b16 %v459, %v458
        %v475 = vpack.c.b16 %v461, %v460
        %v476 = vpack.c.b16 %v463, %v462
        %v477 = vpack.c.b16 %v465, %v464
        %v478 = vpack.c.b16 %v467, %v466
        %v479 = vpack.c.b16 %v469, %v468
        %v480 = vpack.c.b16 %v471, %v470
        %v481 = vpack.c.b16 %v473, %v472
        %490 = vmatprep.subr.bf16.mxu0 0
        %491 = vmatpush1.bf16.msra.mxu0 %v481
        %492 = vmatprep.subr.bf16.mxu0 0
        %493 = vmatpush1.bf16.msra.mxu0 %v480
        %494 = vmatprep.subr.bf16.mxu0 0
        %495 = vmatpush1.bf16.msra.mxu0 %v479
        %496 = vmatprep.subr.bf16.mxu0 0
        %497 = vmatpush1.bf16.msra.mxu0 %v478
        %498 = vmatprep.subr.bf16.mxu0 0
        %499 = vmatpush1.bf16.msra.mxu0 %v477
        %500 = vmatprep.subr.bf16.mxu0 0
        %501 = vmatpush1.bf16.msra.mxu0 %v476
        %502 = vmatprep.subr.bf16.mxu0 0
        %503 = vmatpush1.bf16.msra.mxu0 %v475
        %504 = vmatprep.subr.bf16.mxu0 0
        %505 = vmatpush1.bf16.msra.mxu0 %v474
        %506 = vmatprep.subr.bf16.mxu0 0
        %507 = vmatpush2.bf16.msra.mxu0 0
        %508 = vmatprep.subr.bf16.mxu0 0
        %509 = vmatpush2.bf16.msra.mxu0 0
        %510 = vmatprep.subr.bf16.mxu0 0
        %511 = vmatpush2.bf16.msra.mxu0 0
        %512 = vmatprep.subr.bf16.mxu0 0
        %513 = vmatpush2.bf16.msra.mxu0 0
        %514 = vmatprep.subr.bf16.mxu0 0
        %515 = vmatpush2.bf16.msra.mxu0 0
        %516 = vmatprep.subr.bf16.mxu0 0
        %517 = vmatpush2.bf16.msra.mxu0 0
        %518 = vmatprep.subr.bf16.mxu0 0
        %519 = vmatpush2.bf16.msra.mxu0 0
        %520 = vmatprep.subr.bf16.mxu0 0
        %521 = vmatpush2.bf16.msra.mxu0 0
        %522 = vmatprep.mubr.bf16.mxu0 0
        %523 = vmatmul.mubr.bf16.gmra.mxu0 %v417
        %v524 = vpop.f32.mrf.mxu0
        %v525 = vadd.f32 %v440, %v524
        %v526 = vpop.f32.mrf.mxu0
        %v527 = vpop.f32.mrf.mxu0
        %v528 = vadd.f32 %v440, %v527
        %v529 = vpop.f32.mrf.mxu0
        %530 = vmatprep.mubr.bf16.mxu0 0
        %531 = vmatmul.mubr.bf16.gmra.mxu0 %v418
        %v532 = vpop.f32.mrf.mxu0
        %v533 = vadd.f32 %v440, %v532
        %v534 = vpop.f32.mrf.mxu0
        %v535 = vpop.f32.mrf.mxu0
        %v536 = vadd.f32 %v440, %v535
        %v537 = vpop.f32.mrf.mxu0
        %538 = vdwg.mxu0
        %v539 = vmax.f32 %v525, 0.0
        %v540 = vmax.f32 %v528, 0.0
        %v541 = vmax.f32 %v533, 0.0
        %v542 = vmax.f32 %v536, 0.0
        %v543 = vpack.c.bf16 %v540, %v539
        %v544 = vpack.c.bf16 %v542, %v541
        %v545 = vld [vmem:[#allocation4] sm:$0xf]
        %v546 = vld [vmem:[#allocation4 + $0x4] sm:$0xf]
        %v547 = vld [vmem:[#allocation4 + $0x8] sm:$0xf]
        %v548 = vld [vmem:[#allocation4 + $0xc] sm:$0xf]
        %v549 = vld [vmem:[#allocation4 + $0x10] sm:$0xf]
        %v550 = vld [vmem:[#allocation4 + $0x14] sm:$0xf]
        %v551 = vld [vmem:[#allocation4 + $0x18] sm:$0xf]
        %v552 = vld [vmem:[#allocation4 + $0x1c] sm:$0xf]
        %v553 = vld [vmem:[#allocation4 + $0x20] sm:$0xf]
        %v554 = vld [vmem:[#allocation4 + $0x24] sm:$0xf]
        %v555 = vld [vmem:[#allocation4 + $0x28] sm:$0xf]
        %v556 = vld [vmem:[#allocation4 + $0x2c] sm:$0xf]
        %v557 = vld [vmem:[#allocation4 + $0x30] sm:$0xf]
        %v558 = vld [vmem:[#allocation4 + $0x34] sm:$0xf]
        %v559 = vld [vmem:[#allocation4 + $0x38] sm:$0xf]
        %v560 = vld [vmem:[#allocation4 + $0x3c] sm:$0xf]
        %v561 = vld [vmem:[%s6] sm:$0x1]
        %v563 = vlaneseq
        %v564 = vshrl.u32 %v563, 7
        %v565 = vsub.s32 0, %v564
        %v566 = vrot.slane %v561, %v565
        %v584 = vunpack.c.l.b16 %v545
        %v585 = vunpack.c.l.b16 %v546
        %v586 = vunpack.c.l.b16 %v547
        %v587 = vunpack.c.l.b16 %v548
        %v588 = vunpack.c.l.b16 %v549
        %v589 = vunpack.c.l.b16 %v550
        %v590 = vunpack.c.l.b16 %v551
        %v591 = vunpack.c.l.b16 %v552
        %v592 = vunpack.c.l.b16 %v553
        %v593 = vunpack.c.l.b16 %v554
        %v594 = vunpack.c.l.b16 %v555
        %v595 = vunpack.c.l.b16 %v556
        %v596 = vunpack.c.l.b16 %v557
        %v597 = vunpack.c.l.b16 %v558
        %v598 = vunpack.c.l.b16 %v559
        %v599 = vunpack.c.l.b16 %v560
        %v600 = vpack.c.b16 %v585, %v584
        %v601 = vpack.c.b16 %v587, %v586
        %v602 = vpack.c.b16 %v589, %v588
        %v603 = vpack.c.b16 %v591, %v590
        %v604 = vpack.c.b16 %v593, %v592
        %v605 = vpack.c.b16 %v595, %v594
        %v606 = vpack.c.b16 %v597, %v596
        %v607 = vpack.c.b16 %v599, %v598
        %616 = vmatprep.subr.bf16.mxu0 0
        %617 = vmatpush1.bf16.msra.mxu0 %v607
        %618 = vmatprep.subr.bf16.mxu0 0
        %619 = vmatpush1.bf16.msra.mxu0 %v606
        %620 = vmatprep.subr.bf16.mxu0 0
        %621 = vmatpush1.bf16.msra.mxu0 %v605
        %622 = vmatprep.subr.bf16.mxu0 0
        %623 = vmatpush1.bf16.msra.mxu0 %v604
        %624 = vmatprep.subr.bf16.mxu0 0
        %625 = vmatpush1.bf16.msra.mxu0 %v603
        %626 = vmatprep.subr.bf16.mxu0 0
        %627 = vmatpush1.bf16.msra.mxu0 %v602
        %628 = vmatprep.subr.bf16.mxu0 0
        %629 = vmatpush1.bf16.msra.mxu0 %v601
        %630 = vmatprep.subr.bf16.mxu0 0
        %631 = vmatpush1.bf16.msra.mxu0 %v600
        %632 = vmatprep.subr.bf16.mxu0 0
        %633 = vmatpush2.bf16.msra.mxu0 0
        %634 = vmatprep.subr.bf16.mxu0 0
        %635 = vmatpush2.bf16.msra.mxu0 0
        %636 = vmatprep.subr.bf16.mxu0 0
        %637 = vmatpush2.bf16.msra.mxu0 0
        %638 = vmatprep.subr.bf16.mxu0 0
        %639 = vmatpush2.bf16.msra.mxu0 0
        %640 = vmatprep.subr.bf16.mxu0 0
        %641 = vmatpush2.bf16.msra.mxu0 0
        %642 = vmatprep.subr.bf16.mxu0 0
        %643 = vmatpush2.bf16.msra.mxu0 0
        %644 = vmatprep.subr.bf16.mxu0 0
        %645 = vmatpush2.bf16.msra.mxu0 0
        %646 = vmatprep.subr.bf16.mxu0 0
        %647 = vmatpush2.bf16.msra.mxu0 0
        %648 = vmatprep.mubr.bf16.mxu0 0
        %649 = vmatmul.mubr.bf16.gmra.mxu0 %v543
        %v650 = vpop.f32.mrf.mxu0
        %v651 = vadd.f32 %v566, %v650
        %v652 = vpop.f32.mrf.mxu0
        %v653 = vpop.f32.mrf.mxu0
        %v654 = vadd.f32 %v566, %v653
        %v655 = vpop.f32.mrf.mxu0
        %656 = vmatprep.mubr.bf16.mxu0 0
        %657 = vmatmul.mubr.bf16.gmra.mxu0 %v544
        %v658 = vpop.f32.mrf.mxu0
        %v659 = vadd.f32 %v566, %v658
        %v660 = vpop.f32.mrf.mxu0
        %v661 = vpop.f32.mrf.mxu0
        %v662 = vadd.f32 %v566, %v661
        %v663 = vpop.f32.mrf.mxu0
        %664 = vdwg.mxu0
        %665 = vst [vmem:[%s310] sm:$0xff] %v651
        %666 = vst [vmem:[%s310 + $0x8] sm:$0xff] %v654
        %667 = vst [vmem:[%s310 + $0x10] sm:$0xff] %v659
        %668 = vst [vmem:[%s310 + $0x18] sm:$0xff] %v662
        %s669 = sand.u32 %s180, 1
        %s670 = sand.u32 %s180, 1
        %s671 = smul.addr %s670, 32
        %s672 = scalar_lea.vmem [#allocation6], %s671
        // Predicated region
        $region57: #{_forward_jit.1} parent=47 // pred_check
          %p673 = pneg %p190
        $region58: #{_forward_jit.1} parent=47 // pred_check_branch
          %675 = sbr.rel (%p673) target = $region60
        $region59: #{_forward_jit.1} parent=47 // pred_region
          %s676 = smul.u32 4, %s20
          %s677 = ssub.s32 6, %s676
          %p678 = scmp.lt.s32.totalorder %s677, 4
          %s679 = scalar_select %p678, %s677, 4
          %s680 = smul.u32 128, %s679
          %p681 = scmp.ne.s32.totalorder 0, %s680
          %s682 = smul.addr %s676, 8
          %s683 = scalar_lea.vmem %s7, %s682
          // Predicated region
          $region61: #{_forward_jit.1} parent=59 // pred_check
            %p684 = pneg %p681
          $region62: #{_forward_jit.1} parent=59 // pred_check_branch
            %686 = sbr.rel (%p684) target = $region64
          $region63: #{_forward_jit.1} parent=59 // pred_region
            // Predicated region
            $region65: #{_forward_jit.1} parent=63 // pred_check
              _
            $region66: #{_forward_jit.1} parent=63 // pred_check_branch
              %688 = sbr.rel (0) target = $region68
            $region67: #{_forward_jit.1} parent=63 // pred_region
              // Predicated region
              $region87: #{_forward_jit.1} parent=67 // pred_check
                _
              $region88: #{_forward_jit.1} parent=67 // pred_check_branch
                %744 = sbr.rel (0) target = $region90
              $region89: #{_forward_jit.1} parent=67 // pred_region
                %s745 = sshrl.u32 %s679, 2
                // While loop
                $region91: #{_forward_jit.1} parent=89 // loop_pre_header
                  _
                $region92: #{_forward_jit.1} parent=89 // loop_header
                  %s747 = sphi 0, %s749
                  %p748 = scmp.ge.s32.totalorder %s747, %s745
                  %s752 = sphi 0, %s765
                  %s753 = sphi %s672, %s768
                  %s754 = sphi %s683, %s769
                $region93: #{_forward_jit.1} parent=89 // loop_header_branch
                  %751 = sbr.rel (%p748) target = $region97
                $region94: #{_forward_jit.1} parent=89 // loop_body
                  %v755 = vld [vmem:[%s753] sm:$0xff]
                  %756 = vst [vmem:[%s754] sm:$0xff] %v755
                  %v757 = vld [vmem:[%s753 + $0x8] sm:$0xff]
                  %758 = vst [vmem:[%s754 + $0x8] sm:$0xff] %v757
                  %v759 = vld [vmem:[%s753 + $0x10] sm:$0xff]
                  %760 = vst [vmem:[%s754 + $0x10] sm:$0xff] %v759
                  %v761 = vld [vmem:[%s753 + $0x18] sm:$0xff]
                  %762 = vst [vmem:[%s754 + $0x18] sm:$0xff] %v761
                  %s763 = sadd.s32 1, %s752
                  %p764 = scmp.ge.s32.totalorder %s763, %s745
                  %s765 = scalar_select %p764, 0, %s763
                  %s766 = smul.u32 %s765, 32
                  %s767 = smul.u32 %s765, 32
                  %s768 = scalar_lea.vmem %s672, %s766 [#allocation6]
                  %s769 = scalar_lea.vmem %s683, %s767
                $region95: #{_forward_jit.1} parent=89 // loop_footer
                  %s749 = sadd.s32 %s747, 1
                $region96: #{_forward_jit.1} parent=89 // loop_footer_branch
                  %746 = sbr.rel target = $region92
                $region97: #{_forward_jit.1} parent=89 // loop_exit
                  _
                %s770 = sshrl.u32 %s679, 2
                %s771 = sand.u32 %s679, 3
                %s772 = smul.u32 %s770, 4
                %s773 = smul.u32 8, %s772
                %s774 = scalar_lea.vmem %s672, %s773 [#allocation6]
                %s775 = smul.u32 8, %s772
                %s776 = scalar_lea.vmem %s683, %s775
                // While loop
                $region98: #{_forward_jit.1} parent=89 // loop_pre_header
                  _
                $region99: #{_forward_jit.1} parent=89 // loop_header
                  %s778 = sphi 0, %s780
                  %p779 = scmp.ge.s32.totalorder %s778, %s771
                  %s783 = sphi 0, %s790
                  %s784 = sphi %s774, %s793
                  %s785 = sphi %s776, %s794
                $region100: #{_forward_jit.1} parent=89 // loop_header_branch
                  %782 = sbr.rel (%p779) target = $region104
                $region101: #{_forward_jit.1} parent=89 // loop_body
                  %v786 = vld [vmem:[%s784] sm:$0xff]
                  %787 = vst [vmem:[%s785] sm:$0xff] %v786
                  %s788 = sadd.s32 1, %s783
                  %p789 = scmp.ge.s32.totalorder %s788, %s771
                  %s790 = scalar_select %p789, 0, %s788
                  %s791 = smul.u32 %s790, 8
                  %s792 = smul.u32 %s790, 8
                  %s793 = scalar_lea.vmem %s774, %s791 [#allocation6]
                  %s794 = scalar_lea.vmem %s776, %s792
                $region102: #{_forward_jit.1} parent=89 // loop_footer
                  %s780 = sadd.s32 %s778, 1
                $region103: #{_forward_jit.1} parent=89 // loop_footer_branch
                  %777 = sbr.rel target = $region99
                $region104: #{_forward_jit.1} parent=89 // loop_exit
                  _
              $region90: #{_forward_jit.1} parent=67 // pred_fallthru
                _
              // Predicated region
              $region105: #{_forward_jit.1} parent=67 // pred_check
                _
              $region106: #{_forward_jit.1} parent=67 // pred_check_branch
                %796 = sbr.rel target = $region108
              $region107: #{_forward_jit.1} parent=67 // pred_region
                _
              $region108: #{_forward_jit.1} parent=67 // pred_fallthru
                _
            $region68: #{_forward_jit.1} parent=63 // pred_fallthru
              _
            // Predicated region
            $region69: #{_forward_jit.1} parent=63 // pred_check
              _
            $region70: #{_forward_jit.1} parent=63 // pred_check_branch
              %690 = sbr.rel target = $region72
            $region71: #{_forward_jit.1} parent=63 // pred_region
              %s692 = ssub.s32 256, 1
              %s693 = sshrl.u32 %s679, 2
              // While loop
              $region73: #{_forward_jit.1} parent=71 // loop_pre_header
                _
              $region74: #{_forward_jit.1} parent=71 // loop_header
                %s695 = sphi 0, %s697
                %p696 = scmp.ge.s32.totalorder %s695, %s693
                %s700 = sphi 0, %s713
                %s701 = sphi %s672, %s716
                %s702 = sphi %s683, %s717
              $region75: #{_forward_jit.1} parent=71 // loop_header_branch
                %699 = sbr.rel (%p696) target = $region79
              $region76: #{_forward_jit.1} parent=71 // loop_body
                %v703 = vld [vmem:[%s701] sm:%s692]
                %704 = vst [vmem:[%s702] sm:%s692] %v703
                %v705 = vld [vmem:[%s701 + $0x8] sm:%s692]
                %706 = vst [vmem:[%s702 + $0x8] sm:%s692] %v705
                %v707 = vld [vmem:[%s701 + $0x10] sm:%s692]
                %708 = vst [vmem:[%s702 + $0x10] sm:%s692] %v707
                %v709 = vld [vmem:[%s701 + $0x18] sm:%s692]
                %710 = vst [vmem:[%s702 + $0x18] sm:%s692] %v709
                %s711 = sadd.s32 1, %s700
                %p712 = scmp.ge.s32.totalorder %s711, %s693
                %s713 = scalar_select %p712, 0, %s711
                %s714 = smul.u32 %s713, 32
                %s715 = smul.u32 %s713, 32
                %s716 = scalar_lea.vmem %s672, %s714 [#allocation6]
                %s717 = scalar_lea.vmem %s683, %s715
              $region77: #{_forward_jit.1} parent=71 // loop_footer
                %s697 = sadd.s32 %s695, 1
              $region78: #{_forward_jit.1} parent=71 // loop_footer_branch
                %694 = sbr.rel target = $region74
              $region79: #{_forward_jit.1} parent=71 // loop_exit
                _
              %s718 = sshrl.u32 %s679, 2
              %s719 = sand.u32 %s679, 3
              %s720 = smul.u32 %s718, 4
              %s721 = smul.u32 8, %s720
              %s722 = scalar_lea.vmem %s672, %s721 [#allocation6]
              %s723 = smul.u32 8, %s720
              %s724 = scalar_lea.vmem %s683, %s723
              // While loop
              $region80: #{_forward_jit.1} parent=71 // loop_pre_header
                _
              $region81: #{_forward_jit.1} parent=71 // loop_header
                %s726 = sphi 0, %s728
                %p727 = scmp.ge.s32.totalorder %s726, %s719
                %s731 = sphi 0, %s738
                %s732 = sphi %s722, %s741
                %s733 = sphi %s724, %s742
              $region82: #{_forward_jit.1} parent=71 // loop_header_branch
                %730 = sbr.rel (%p727) target = $region86
              $region83: #{_forward_jit.1} parent=71 // loop_body
                %v734 = vld [vmem:[%s732] sm:%s692]
                %735 = vst [vmem:[%s733] sm:%s692] %v734
                %s736 = sadd.s32 1, %s731
                %p737 = scmp.ge.s32.totalorder %s736, %s719
                %s738 = scalar_select %p737, 0, %s736
                %s739 = smul.u32 %s738, 8
                %s740 = smul.u32 %s738, 8
                %s741 = scalar_lea.vmem %s722, %s739 [#allocation6]
                %s742 = scalar_lea.vmem %s724, %s740
              $region84: #{_forward_jit.1} parent=71 // loop_footer
                %s728 = sadd.s32 %s726, 1
              $region85: #{_forward_jit.1} parent=71 // loop_footer_branch
                %725 = sbr.rel target = $region81
              $region86: #{_forward_jit.1} parent=71 // loop_exit
                _
            $region72: #{_forward_jit.1} parent=63 // pred_fallthru
              _
          $region64: #{_forward_jit.1} parent=59 // pred_fallthru
            _
          %797 = vnop
        $region60: #{_forward_jit.1} parent=47 // pred_fallthru
          _
      $region48: #{_forward_jit.1} parent=5 // pred_fallthru
        _
      %p798 = scmp.le.s32.totalorder 2, %s15
      // Predicated region
      $region109: #{_forward_jit.1} parent=5 // pred_check
        %p799 = pneg %p798
      $region110: #{_forward_jit.1} parent=5 // pred_check_branch
        %801 = sbr.rel (%p799) target = $region112
      $region111: #{_forward_jit.1} parent=5 // pred_region
        %s802 = ssub.s32 %s15, 2
        // Predicated region
        $region113: #{_forward_jit.1} parent=111 // pred_check
          %p803 = pneg %p196
        $region114: #{_forward_jit.1} parent=111 // pred_check_branch
          %805 = sbr.rel (%p803) target = $region116
        $region115: #{_forward_jit.1} parent=111 // pred_region
          %s806 = sand.u32 %s181, 1
          %s807 = sand.u32 %s181, 1
          %s808 = smul.addr %s807, 32
          %s809 = scalar_lea.vmem [#allocation6], %s808
        $region116: #{_forward_jit.1} parent=111 // pred_fallthru
          _
      $region112: #{_forward_jit.1} parent=5 // pred_fallthru
        _
    $region6: #{_forward_jit.1} parent=1 // loop_footer
      %s19 = sadd.s32 1, %s15
    $region7: #{_forward_jit.1} parent=1 // loop_footer_branch
      %14 = sbr.rel target = $region3
    $region8: #{_forward_jit.1} parent=1 // loop_exit
      _
    %810 = vsyncpa [#allocation3], 1
    %s811 = scalar_lea.sflag [#allocation3], 1
    %812 = vsyncpa %s811, 1
    %813 = vsyncpa [#allocation5], 1

</llo_original>
